<compile_context>
chip_gen: v5e
topology: v5e:2x2
jax: 0.10.0
libtpu: 0.0.40
codegen_flags: <defaults>
</compile_context>

<pallas_src>
import functools

import jax
import jax.numpy as jnp
from jax.experimental import pallas as pl
from jax.experimental.pallas import tpu as pltpu

PAIRWISE_EPS = 1e-6  # torch.nn.functional.pairwise_distance default eps


def _round_up(x, m):
    return ((x + m - 1) // m) * m


def _contrastive_loss_kernel(x1_ref, x2_ref, label_ref, out_ref, *,
                             n_rows, tile_n, margin):
    i = pl.program_id(0)

    x1 = x1_ref[...].astype(jnp.float32)          # (tile_n, D)
    x2 = x2_ref[...].astype(jnp.float32)          # (tile_n, D)
    label = label_ref[...].astype(jnp.float32)    # (tile_n, 1)

    # torch pairwise_distance: ||x1 - x2 + eps||_2 along last dim (keepdim)
    diff = x1 - x2 + PAIRWISE_EPS
    dist_sq = jnp.sum(diff * diff, axis=-1, keepdims=True)   # (tile_n, 1)
    dist = jnp.sqrt(dist_sq)

    hinge = jnp.maximum(margin - dist, 0.0)
    # dissimilar term reuses dist_sq directly (no dist*dist recompute)
    per_row = (1.0 - label) * dist_sq + label * hinge * hinge  # (tile_n, 1)

    # mask padded rows of the (possibly ragged) last tile; static Python branch
    if n_rows % tile_n != 0:
        row_ids = i * tile_n + jax.lax.broadcasted_iota(jnp.int32, (tile_n, 1), 0)
        per_row = jnp.where(row_ids < n_rows, per_row, 0.0)

    # one partial sum per tile; mean (divide by true N) finalized in the wrapper
    out_ref[...] = jnp.sum(per_row).reshape(1, 1, 1)


def contrastive_loss(output1, output2, label, *, margin=2.0):
    n, d = output1.shape
    label = jnp.reshape(label, (n, 1)).astype(jnp.float32)

    itemsize = jnp.dtype(output1.dtype).itemsize
    # Keep 2 inputs x 2 pipeline buffers x (tile_n, d) comfortably inside scoped
    # VMEM on all generations (v7x has only 64 MiB physical).
    budget = 16 * 1024 * 1024
    max_rows = max(8, (budget // (4 * d * itemsize)) // 8 * 8)
    tile_n = min(512, max_rows, _round_up(n, 8))
    num_tiles = pl.cdiv(n, tile_n)

    block_bytes = tile_n * d * itemsize
    vmem_limit = int(min(48 * 1024 * 1024,
                         max(4 * 1024 * 1024, 4 * block_bytes + (1 << 20))))

    kernel = functools.partial(_contrastive_loss_kernel,
                               n_rows=n, tile_n=tile_n, margin=float(margin))

    partial_sums = pl.pallas_call(
        kernel,
        out_shape=jax.ShapeDtypeStruct((num_tiles, 1, 1), jnp.float32),
        grid_spec=pltpu.PrefetchScalarGridSpec(
            num_scalar_prefetch=0,
            grid=(num_tiles,),
            in_specs=[
                pl.BlockSpec((tile_n, d), lambda i: (i, 0)),
                pl.BlockSpec((tile_n, d), lambda i: (i, 0)),
                pl.BlockSpec((tile_n, 1), lambda i: (i, 0)),
            ],
            out_specs=pl.BlockSpec((1, 1, 1), lambda i: (i, 0, 0)),
        ),
        compiler_params=pltpu.CompilerParams(
            dimension_semantics=("parallel",),
            vmem_limit_bytes=vmem_limit,
        ),
    )(output1, output2, label)

    return jnp.sum(partial_sums) / jnp.float32(n)


def _reference(output1, output2, label, margin=2.0):
    diff = output1.astype(jnp.float32) - output2.astype(jnp.float32) + PAIRWISE_EPS
    dist = jnp.sqrt(jnp.sum(diff * diff, axis=-1, keepdims=True))
    label = label.reshape(-1, 1).astype(jnp.float32)
    return jnp.mean((1.0 - label) * dist ** 2
                    + label * jnp.maximum(margin - dist, 0.0) ** 2)


if __name__ == "__main__":
    key = jax.random.PRNGKey(0)
    k1, k2, k3, k4, k5, k6 = jax.random.split(key, 6)

    # Case 1: tidy small shape (batch=8, hidden=32)
    N, D = 8, 32
    o1 = jax.random.normal(k1, (N, D), dtype=jnp.float32)
    o2 = jax.random.normal(k2, (N, D), dtype=jnp.float32)
    lbl = jax.random.bernoulli(k3, p=0.5, shape=(N, 1)).astype(jnp.float32)

    loss = jax.block_until_ready(contrastive_loss(o1, o2, lbl))
    ref = _reference(o1, o2, lbl)
    assert jnp.allclose(loss, ref, rtol=1e-5, atol=1e-5), (loss, ref)

    # Case 2: batch not a multiple of the 8-row sublane tiling (exercises masking)
    N2, D2 = 20, 48
    o1b = jax.random.normal(k4, (N2, D2), dtype=jnp.float32)
    o2b = jax.random.normal(k5, (N2, D2), dtype=jnp.float32)
    lblb = jax.random.bernoulli(k6, p=0.5, shape=(N2,)).astype(jnp.float32)

    loss2 = jax.block_until_ready(contrastive_loss(o1b, o2b, lblb))
    ref2 = _reference(o1b, o2b, lblb)
    assert jnp.allclose(loss2, ref2, rtol=1e-5, atol=1e-5), (loss2, ref2)

    print("KERNEL_OK")
</pallas_src>

<mosaic_0001>
module attributes {stable_mosaic.version = 11 : i64} {
  func.func @_contrastive_loss_kernel(%arg0: i32, %arg1: memref<8x32xf32, #tpu.memory_space<vmem>>, %arg2: memref<8x32xf32, #tpu.memory_space<vmem>>, %arg3: memref<8x1xf32, #tpu.memory_space<vmem>>, %arg4: memref<1x1x1xf32, #tpu.memory_space<vmem>>) attributes {dimension_semantics = [#tpu.dimension_semantics<parallel>], iteration_bounds = array<i64: 1>, scalar_prefetch = 0 : i64, scratch_operands = 0 : i64, tpu.core_type = #tpu.core_type<tc>, window_params = [{transform_indices = @transform_0, window_bounds = array<i64: 8, 32>}, {transform_indices = @transform_1, window_bounds = array<i64: 8, 32>}, {transform_indices = @transform_2, window_bounds = array<i64: 8, 1>}, {transform_indices = @transform_3, window_bounds = array<i64: 1, 1, 1>}]} {
    %c0 = arith.constant 0 : index
    %c0_0 = arith.constant 0 : index
    %0 = vector.load %arg1[%c0, %c0_0] : memref<8x32xf32, #tpu.memory_space<vmem>>, vector<8x32xf32>
    %c0_1 = arith.constant 0 : index
    %c0_2 = arith.constant 0 : index
    %1 = vector.load %arg2[%c0_1, %c0_2] : memref<8x32xf32, #tpu.memory_space<vmem>>, vector<8x32xf32>
    %c0_3 = arith.constant 0 : index
    %c0_4 = arith.constant 0 : index
    %2 = vector.load %arg3[%c0_3, %c0_4] : memref<8x1xf32, #tpu.memory_space<vmem>>, vector<8x1xf32>
    %3 = arith.subf %0, %1 : vector<8x32xf32>
    %cst = arith.constant 9.99999997E-7 : f32
    %4 = vector.broadcast %cst : f32 to vector<8x32xf32>
    %5 = arith.addf %3, %4 : vector<8x32xf32>
    %6 = arith.mulf %5, %5 : vector<8x32xf32>
    %cst_5 = arith.constant dense<0.000000e+00> : vector<8xf32>
    %7 = vector.multi_reduction <add>, %6, %cst_5 [1] : vector<8x32xf32> to vector<8xf32>
    %8 = vector.shape_cast %7 : vector<8xf32> to vector<8x1xf32>
    %9 = math.sqrt %8 : vector<8x1xf32>
    %cst_6 = arith.constant 2.000000e+00 : f32
    %10 = vector.broadcast %cst_6 : f32 to vector<8x1xf32>
    %11 = arith.subf %10, %9 : vector<8x1xf32>
    %cst_7 = arith.constant 0.000000e+00 : f32
    %12 = vector.broadcast %cst_7 : f32 to vector<8x1xf32>
    %13 = arith.maximumf %11, %12 : vector<8x1xf32>
    %cst_8 = arith.constant 1.000000e+00 : f32
    %14 = vector.broadcast %cst_8 : f32 to vector<8x1xf32>
    %15 = arith.subf %14, %2 : vector<8x1xf32>
    %16 = arith.mulf %15, %8 : vector<8x1xf32>
    %17 = arith.mulf %2, %13 : vector<8x1xf32>
    %18 = arith.mulf %17, %13 : vector<8x1xf32>
    %19 = arith.addf %16, %18 : vector<8x1xf32>
    %20 = vector.shape_cast %19 : vector<8x1xf32> to vector<1x8x1xf32>
    %cst_9 = arith.constant dense<0.000000e+00> : vector<1xf32>
    %21 = vector.multi_reduction <add>, %20, %cst_9 [1, 2] : vector<1x8x1xf32> to vector<1xf32>
    %22 = vector.shape_cast %21 : vector<1xf32> to vector<1x1x1xf32>
    %23 = vector.extract %22[0, 0, 0] : f32 from vector<1x1x1xf32>
    %24 = vector.broadcast %23 : f32 to vector<1x1x1xf32>
    %c0_10 = arith.constant 0 : index
    %c0_11 = arith.constant 0 : index
    %c0_12 = arith.constant 0 : index
    %25 = vector.load %arg4[%c0_10, %c0_11, %c0_12] : memref<1x1x1xf32, #tpu.memory_space<vmem>>, vector<1x1x1xf32>
    tpu.vector_store %arg4[%c0_10, %c0_11, %c0_12], %24 {strides = array<i32>} : memref<1x1x1xf32, #tpu.memory_space<vmem>>, vector<1x1x1xf32>,
    return
  }
  func.func @transform_0(%arg0: i32) -> (i32, i32) {
    %c0_i32 = arith.constant 0 : i32
    %c0_i32_0 = arith.constant 0 : i32
    return %arg0, %c0_i32 : i32, i32
  }
  func.func @transform_1(%arg0: i32) -> (i32, i32) {
    %c0_i32 = arith.constant 0 : i32
    %c0_i32_0 = arith.constant 0 : i32
    return %arg0, %c0_i32 : i32, i32
  }
  func.func @transform_2(%arg0: i32) -> (i32, i32) {
    %c0_i32 = arith.constant 0 : i32
    %c0_i32_0 = arith.constant 0 : i32
    return %arg0, %c0_i32 : i32, i32
  }
  func.func @transform_3(%arg0: i32) -> (i32, i32, i32) {
    %c0_i32 = arith.constant 0 : i32
    %c0_i32_0 = arith.constant 0 : i32
    %c0_i32_1 = arith.constant 0 : i32
    return %arg0, %c0_i32, %c0_i32_0 : i32, i32, i32
  }
}

</mosaic_0001>

<llo_original>
// kernel: tpu_custom_call.1
$region0: #{tpu_custom_call.1}
  #allocation0 [shape = 'u32[]', space=smem, size = 0x4, offset = 0x4, fixed_abs, tag = 'smem constant byte address 0x4 - core index']
  #allocation1 [shape = 'u32[72,128]{1,0:T(1,128)}', space=vmem, size = 0x9000, scoped, tag = 'internal scratch']
  %s0 = inlined_call_operand.vmem [shape: f32[8,32], index: 0, kind: input, shape index: {}]
  %s1 = inlined_call_operand.hbm [shape: f32[8,32], index: 1, kind: input, shape index: {}]
  %s2 = inlined_call_operand.vmem [shape: f32[8,1], index: 2, kind: input, shape index: {}]
  %s3 = inlined_call_operand.hbm [shape: f32[1,1,1], index: 3, kind: output, shape index: {}]
  %s4 = sld [smem:[#allocation0]]
  $region26: #{tpu_custom_call.1} parent=0
    _
  %s6 = ssub.s32 1, %s4
  %s7 = scalar_select 0, %s6, %s4
  $region1: #{tpu_custom_call.1} parent=0
    #allocation2 [shape = 'u8[4096]{0}', space=vmem, size = 0x1000, scoped, tag = 'input window, operand 1, single buffered']
    #allocation3 [shape = 's32[1]{0}', space=sflag, size = 0x4, scoped, tag = 'scoped memory for tpu_custom_call.1']
    #allocation4 [shape = 's32[1]{0}', space=sflag, size = 0x4, scoped, tag = 'scoped memory for tpu_custom_call.1']
    #allocation5 [shape = 'u8[512]{0}', space=vmem, size = 0x400, scoped, tag = 'output window, operand 0, single buffered']
    %8 = vsyncpa [#allocation3], 0
    %9 = vsyncpa [#allocation4], 0
    // Predicated region
    $region2: #{tpu_custom_call.1} parent=1 // pred_check
      _
    $region3: #{tpu_custom_call.1} parent=1 // pred_check_branch
      %11 = sbr.rel (0) target = $region5
    $region4: #{tpu_custom_call.1} parent=1 // pred_region
      _
    $region5: #{tpu_custom_call.1} parent=1 // pred_fallthru
      _
    // Predicated region
    $region6: #{tpu_custom_call.1} parent=1 // pred_check
      _
    $region7: #{tpu_custom_call.1} parent=1 // pred_check_branch
      %13 = sbr.rel (0) target = $region9
    $region8: #{tpu_custom_call.1} parent=1 // pred_region
      %15 = vsyncadd [#allocation3], 0
      %s17 = sshll.u32 %s1, 4
      %s18 = int_to_ptr.hbm [resolvable:$true] %s17
      %s19 = sshll.u32 [#allocation2], 4
      %s20 = int_to_ptr.vmem [resolvable:$true] %s19
      %22 = dma.hbm_to_vmem [thread:$0]  %s18, 128, %s20, [#allocation3]
    $region9: #{tpu_custom_call.1} parent=1 // pred_fallthru
      _
    // Predicated region
    $region10: #{tpu_custom_call.1} parent=1 // pred_check
      _
    $region11: #{tpu_custom_call.1} parent=1 // pred_check_branch
      %24 = sbr.rel (0) target = $region13
    $region12: #{tpu_custom_call.1} parent=1 // pred_region
      _
    $region13: #{tpu_custom_call.1} parent=1 // pred_fallthru
      _
    // Predicated region
    $region14: #{tpu_custom_call.1} parent=1 // pred_check
      _
    $region15: #{tpu_custom_call.1} parent=1 // pred_check_branch
      %26 = sbr.rel (0) target = $region17
    $region16: #{tpu_custom_call.1} parent=1 // pred_region
      %28 = dma.done [#allocation3], 128
    $region17: #{tpu_custom_call.1} parent=1 // pred_fallthru
      _
    %v29 = vld [vmem:[%s0] sm:$0xff]
    %v30 = vld [vmem:[#allocation2] sm:$0xff]
    %v31 = vld [vmem:[%s2] sm:$0xff]
    %v32 = vsub.f32 %v29, %v30
    %v33 = vadd.f32 %v32, 1e-06
    %v34 = vmul.f32 %v33, %v33
    %vm35 = vcmask 261120
    %v36 = vsel %vm35, %v34, 0.0
    %37 = vadd.xlane.f32.xlu0 %v36
    %v38 = vpop.xlane.xlu0 %37
    %v39 = vrsqrt.pop %v38
    %v40 = vmul.f32 %v39, %v38
    %v41 = vmul.f32 %v40, %v39
    %v42 = vmul.f32 0.5, %v41
    %v43 = vsub.f32 1.5, %v42
    %v44 = vmul.f32 %v39, %v43
    %v45 = vmul.f32 %v38, %v44
    %vm46 = vcmp.eq.f32.partialorder %v38, inf
    %v47 = vsel %vm46, %v38, %v45
    %vm48 = vcmp.eq.f32.partialorder %v38, 0.0
    %v49 = vand.u32 %v38, 2147483648
    %v50 = vsel %vm48, %v49, %v47
    %v51 = vsub.f32 2.0, %v50
    %v52 = vmax.f32 %v51, 0.0
    %v53 = vsub.f32 1.0, %v31
    %v54 = vmul.f32 %v53, %v38
    %v55 = vmul.f32 %v31, %v52
    %v56 = vmul.f32 %v55, %v52
    %v57 = vadd.f32 %v54, %v56
    %vm58 = vcmask 7168
    %v59 = vsel %vm58, %v57, 0.0
    %60 = vadd.xlane.f32.xlu0 %v59
    %v61 = vpop.xlane.xlu0 %60
    %v62 = vrot.slane %v61, 4
    %v63 = vadd.f32 %v61, %v62
    %v64 = vrot.slane %v63, 2
    %v65 = vadd.f32 %v63, %v64
    %v66 = vrot.slane %v65, 1
    %v67 = vadd.f32 %v65, %v66
    %s68 = vtos %v67
    %v69 = vstv %s68
    %vm70 = vcmask 0
    %71 = vst.msk [vmem:[#allocation5] sm:$0x1] %vm70, %v69
    // Predicated region
    $region18: #{tpu_custom_call.1} parent=1 // pred_check
      _
    $region19: #{tpu_custom_call.1} parent=1 // pred_check_branch
      %73 = sbr.rel (0) target = $region21
    $region20: #{tpu_custom_call.1} parent=1 // pred_region
      %75 = vsyncadd [#allocation4], 0
      %s77 = sshll.u32 [#allocation5], 4
      %s78 = int_to_ptr.vmem [resolvable:$true] %s77
      %s79 = sshll.u32 %s3, 4
      %s80 = int_to_ptr.hbm [resolvable:$true] %s79
      %82 = dma.vmem_to_hbm [thread:$0]  %s78, 16, %s80, [#allocation4]
    $region21: #{tpu_custom_call.1} parent=1 // pred_fallthru
      _
    // Predicated region
    $region22: #{tpu_custom_call.1} parent=1 // pred_check
      _
    $region23: #{tpu_custom_call.1} parent=1 // pred_check_branch
      %84 = sbr.rel (0) target = $region25
    $region24: #{tpu_custom_call.1} parent=1 // pred_region
      %86 = dma.done [#allocation4], 16
    $region25: #{tpu_custom_call.1} parent=1 // pred_fallthru
      _
    %87 = vsyncpa [#allocation3], 1
    %88 = vsyncpa [#allocation4], 1

</llo_original>
